<compile_context>
chip_gen: v7x
topology: tpu7x:2x2x1
jax: 0.10.0
libtpu: 0.0.40
codegen_flags: <defaults>
</compile_context>

<pallas_src>
import functools

import jax
import jax.numpy as jnp
from jax.experimental import pallas as pl
from jax.experimental.pallas import tpu as pltpu

LANE = 128


def _round_up(x, m):
    return (x + m - 1) // m * m


def _pad_to(x, shape):
    pads = [(0, t - s) for s, t in zip(x.shape, shape)]
    if any(p[1] for p in pads):
        x = jnp.pad(x, pads)
    return x


def _gcn_fused_kernel(adj_ref, ndst_ref, nsrc_ref, x_ref, w1_ref, b1_ref,
                      w2_ref, b2_ref, o_ref, *scratch,
                      tm, agg_first_l1, agg_first_l2):
    # adj_ref : [TM, Np]  raw 0/1 adjacency tile (bf16), rows = dst, cols = src
    # ndst_ref: [TM, 1]   per-dst degree scale (f32)
    # nsrc_ref: [1, Np]   per-src degree scale (f32)
    # x_ref   : [Np, Fin_p]  (bf16),  w*_ref padded weights (bf16)
    # b*_ref  : [1, F*_p] biases (f32)
    # scratch : h (Np, hid_p) bf16, plus optional XW1 / HW2 caches (static).
    idx = 0
    h_ref = scratch[idx]; idx += 1
    xw1_ref = None
    hw2_ref = None
    if not agg_first_l1:
        xw1_ref = scratch[idx]; idx += 1
    if not agg_first_l2:
        hw2_ref = scratch[idx]; idx += 1

    l = pl.program_id(0)          # 0 = first GraphConv, 1 = second GraphConv
    i = pl.program_id(1)          # destination-row tile
    row0 = pl.multiple_of(i * tm, tm)

    # In-kernel 'both' normalization of the adjacency tile (VPU work, hidden
    # under the MXU slot), then cast to bf16 for the MXU.
    a = (adj_ref[...].astype(jnp.float32)
         * ndst_ref[...] * nsrc_ref[...]).astype(jnp.bfloat16)

    @pl.when(l == 0)
    def _layer1():
        if agg_first_l1:
            # (A @ X) @ W1 : contract A against the narrower padded width.
            ax = jnp.dot(a, x_ref[...], preferred_element_type=jnp.float32)
            y = jnp.dot(ax.astype(jnp.bfloat16), w1_ref[...],
                        preferred_element_type=jnp.float32)
        else:
            # A @ (X @ W1) : pre-multiply once, cache in VMEM, reuse per tile.
            @pl.when(i == 0)
            def _():
                xw1_ref[...] = jnp.dot(
                    x_ref[...], w1_ref[...],
                    preferred_element_type=jnp.float32).astype(xw1_ref.dtype)
            y = jnp.dot(a, xw1_ref[...], preferred_element_type=jnp.float32)
        h = jnp.maximum(y + b1_ref[...], 0.0)       # ReLU activation
        # TODO(synk): training-mode dropout(p=0.5) would be applied here;
        # identity in eval mode.
        h_ref[pl.ds(row0, tm), :] = h.astype(h_ref.dtype)

    @pl.when(l == 1)
    def _layer2():
        if agg_first_l2:
            ah = jnp.dot(a, h_ref[...], preferred_element_type=jnp.float32)
            y = jnp.dot(ah.astype(jnp.bfloat16), w2_ref[...],
                        preferred_element_type=jnp.float32)
        else:
            @pl.when(i == 0)
            def _():
                hw2_ref[...] = jnp.dot(
                    h_ref[...], w2_ref[...],
                    preferred_element_type=jnp.float32).astype(hw2_ref.dtype)
            y = jnp.dot(a, hw2_ref[...], preferred_element_type=jnp.float32)
        o_ref[...] = (y + b2_ref[...]).astype(o_ref.dtype)


def gcn_forward(adj_dst_src, features, params):
    """Two-layer GCN forward (eval mode: dropout = identity).

    adj_dst_src[d, s] = 1 means an edge s -> d (rows index destination nodes).
    """
    w1, b1, w2, b2 = params
    n, fin = features.shape
    hid = w1.shape[1]
    fout = w2.shape[1]

    n_p = _round_up(n, LANE)          # pad N to 128 (lane-dense A, full MXU depth)
    fin_p = _round_up(fin, LANE)
    hid_p = _round_up(hid, LANE)
    fout_p = _round_up(fout, LANE)

    tm = 256 if (n_p % 256 == 0) else 128
    r = n_p // tm

    # Contraction-order heuristic on PADDED widths (the MXU works at these).
    agg1 = fin_p <= hid_p             # layer 1: (A@X)@W1 vs A@(X@W1)
    agg2 = hid_p <= fout_p            # layer 2: (A@h)@W2 vs A@(h@W2)

    adj = adj_dst_src.astype(jnp.float32)
    in_deg = jnp.maximum(adj.sum(axis=1), 1.0)   # per-dst (allow_zero_in_degree)
    out_deg = jnp.maximum(adj.sum(axis=0), 1.0)  # per-src
    norm_dst = (in_deg ** -0.5).reshape(n, 1).astype(jnp.float32)
    norm_src = (out_deg ** -0.5).reshape(1, n).astype(jnp.float32)

    # Zero padding keeps the math exact (padded A rows/cols are zero; padded
    # feature columns / weight rows are zero; result is sliced back).
    adj_p = _pad_to(adj.astype(jnp.bfloat16), (n_p, n_p))
    ndst_p = _pad_to(norm_dst, (n_p, 1))
    nsrc_p = _pad_to(norm_src, (1, n_p))
    x_p = _pad_to(features.astype(jnp.bfloat16), (n_p, fin_p))
    w1_p = _pad_to(w1.astype(jnp.bfloat16), (fin_p, hid_p))
    b1_p = _pad_to(b1.reshape(1, -1).astype(jnp.float32), (1, hid_p))
    w2_p = _pad_to(w2.astype(jnp.bfloat16), (hid_p, fout_p))
    b2_p = _pad_to(b2.reshape(1, -1).astype(jnp.float32), (1, fout_p))

    kernel = functools.partial(_gcn_fused_kernel, tm=tm,
                               agg_first_l1=agg1, agg_first_l2=agg2)

    scratch_shapes = [pltpu.VMEM((n_p, hid_p), jnp.bfloat16)]   # hidden state h
    if not agg1:
        scratch_shapes.append(pltpu.VMEM((n_p, hid_p), jnp.bfloat16))   # X@W1
    if not agg2:
        scratch_shapes.append(pltpu.VMEM((n_p, fout_p), jnp.bfloat16))  # h@W2

    # Cost model at padded shapes / chosen contraction orders.
    flops = (2 * n_p * n_p * (min(fin_p, hid_p) + min(hid_p, fout_p))
             + 2 * n_p * (fin_p * hid_p + hid_p * fout_p))
    bytes_accessed = (2 * 2 * n_p * n_p                                    # A, 2 passes, bf16
                      + 2 * (n_p * fin_p + fin_p * hid_p + hid_p * fout_p)  # bf16 operands
                      + 4 * (hid_p + fout_p + 2 * n_p)                      # biases + norms
                      + 2 * 4 * n_p * fout_p)                               # output writes

    # Explicit VMEM budget (double-buffered inputs + whole-resident operands +
    # scratches), with headroom; keeps us honest across v5e/v6e/v7x limits.
    vmem_est = (2 * tm * n_p * 2
                + 2 * n_p * fin_p * 2
                + 2 * fin_p * hid_p * 2
                + 2 * hid_p * fout_p * 2
                + 2 * tm * fout_p * 4
                + n_p * hid_p * 2
                + (0 if agg1 else n_p * hid_p * 2)
                + (0 if agg2 else n_p * fout_p * 2)
                + (2 * (tm + n_p) + hid_p + fout_p) * 4 * 2
                + tm * max(n_p, fin_p, hid_p) * 4 * 4)
    vmem_limit = int(min(96 * 2 ** 20, max(32 * 2 ** 20, 2 * vmem_est)))

    grid_spec = pltpu.PrefetchScalarGridSpec(
        num_scalar_prefetch=0,
        grid=(2, r),                              # (layer pass, dst-row tile)
        in_specs=[
            pl.BlockSpec((tm, n_p), lambda l, i: (i, 0)),        # adjacency tile
            pl.BlockSpec((tm, 1), lambda l, i: (i, 0)),          # dst degree scale
            pl.BlockSpec((1, n_p), lambda l, i: (0, 0)),         # src degree scale
            pl.BlockSpec((n_p, fin_p), lambda l, i: (0, 0)),     # X (resident)
            pl.BlockSpec((fin_p, hid_p), lambda l, i: (0, 0)),   # W1 (resident)
            pl.BlockSpec((1, hid_p), lambda l, i: (0, 0)),       # b1
            pl.BlockSpec((hid_p, fout_p), lambda l, i: (0, 0)),  # W2 (resident)
            pl.BlockSpec((1, fout_p), lambda l, i: (0, 0)),      # b2
        ],
        out_specs=pl.BlockSpec((tm, fout_p), lambda l, i: (i, 0)),
        scratch_shapes=scratch_shapes,
    )

    out_p = pl.pallas_call(
        kernel,
        out_shape=jax.ShapeDtypeStruct((n_p, fout_p), jnp.float32),
        grid_spec=grid_spec,
        compiler_params=pltpu.CompilerParams(
            # Row-tile axis kept "arbitrary": layer 2 needs all of the
            # core-local h scratch (see megacore note at top of file).
            dimension_semantics=("arbitrary", "arbitrary"),
            vmem_limit_bytes=vmem_limit),
        cost_estimate=pl.CostEstimate(
            flops=flops, transcendentals=0, bytes_accessed=bytes_accessed),
    )(adj_p, ndst_p, nsrc_p, x_p, w1_p, b1_p, w2_p, b2_p)

    return out_p[:n, :fout]


def gcn_reference(adj_dst_src, features, params):
    """Pure-JAX reference (models the bf16 input casts, f32 accumulation)."""
    w1, b1, w2, b2 = params
    adj = adj_dst_src.astype(jnp.float32)
    in_deg = jnp.maximum(adj.sum(axis=1), 1.0)
    out_deg = jnp.maximum(adj.sum(axis=0), 1.0)
    a_hat = (in_deg ** -0.5)[:, None] * adj * (out_deg ** -0.5)[None, :]
    f = lambda t: t.astype(jnp.bfloat16).astype(jnp.float32)
    h = jnp.maximum(f(a_hat) @ f(features) @ f(w1) + b1.reshape(1, -1), 0.0)
    return f(a_hat) @ f(h) @ f(w2) + b2.reshape(1, -1)


if __name__ == "__main__":
    key = jax.random.PRNGKey(0)

    def make_case(case_key, n, fin, hid, fout, density=0.3):
        k_adj, k_feat, k_w1, k_b1, k_w2, k_b2 = jax.random.split(case_key, 6)
        # adj[d, s] = 1 means edge s -> d (rows = destination nodes).
        adj = (jax.random.uniform(k_adj, (n, n)) < density).astype(jnp.float32)
        x = jax.random.normal(k_feat, (n, fin), dtype=jnp.float32)
        w1 = jax.random.normal(k_w1, (fin, hid), dtype=jnp.float32) * (
            (2.0 / (fin + hid)) ** 0.5)
        b1 = 0.1 * jax.random.normal(k_b1, (hid,), dtype=jnp.float32)
        w2 = jax.random.normal(k_w2, (hid, fout), dtype=jnp.float32) * (
            (2.0 / (hid + fout)) ** 0.5)
        b2 = 0.1 * jax.random.normal(k_b2, (fout,), dtype=jnp.float32)
        return adj, x, (w1, b1, w2, b2)

    # (N, in_size, hid_size, out_size):
    #  1) module-default-style toy shapes (both aggregate-first paths)
    #  2) multi row-tile grid (R=3) + X@W1-precompute path (fin_p > hid_p)
    #  3) h@W2-precompute path (hid_p > fout_p)
    cases = [(16, 8, 32, 4),
             (300, 200, 64, 4),
             (130, 16, 200, 4)]

    for case_key, (n, fin, hid, fout) in zip(jax.random.split(key, len(cases)),
                                             cases):
        adj, x, params = make_case(case_key, n, fin, hid, fout)
        out = gcn_forward(adj, x, params)
        jax.block_until_ready(out)
        ref = gcn_reference(adj, x, params)
        assert out.shape == (n, fout)
        err = float(jnp.max(jnp.abs(out - ref)))
        assert jnp.allclose(out, ref, atol=5e-2, rtol=5e-2), err

    print("KERNEL_OK")
</pallas_src>

<mosaic_0001>
module attributes {stable_mosaic.version = 11 : i64} {
  func.func @_gcn_fused_kernel(%arg0: i32, %arg1: i32, %arg2: memref<128x128xbf16, #tpu.memory_space<vmem>>, %arg3: memref<128x1xf32, #tpu.memory_space<vmem>>, %arg4: memref<1x128xf32, #tpu.memory_space<vmem>>, %arg5: memref<128x128xbf16, #tpu.memory_space<vmem>>, %arg6: memref<128x128xbf16, #tpu.memory_space<vmem>>, %arg7: memref<1x128xf32, #tpu.memory_space<vmem>>, %arg8: memref<128x128xbf16, #tpu.memory_space<vmem>>, %arg9: memref<1x128xf32, #tpu.memory_space<vmem>>, %arg10: memref<128x128xf32, #tpu.memory_space<vmem>>, %arg11: memref<128x128xbf16, #tpu.memory_space<vmem>>) attributes {dimension_semantics = [#tpu.dimension_semantics<arbitrary>, #tpu.dimension_semantics<arbitrary>], iteration_bounds = array<i64: 2, 1>, scalar_prefetch = 0 : i64, scratch_operands = 1 : i64, tpu.core_type = #tpu.core_type<tc>, window_params = [{transform_indices = @transform_0, window_bounds = array<i64: 128, 128>}, {transform_indices = @transform_1, window_bounds = array<i64: 128, 1>}, {pipeline_mode = #tpu.pipeline_mode<synchronous>, transform_indices = @transform_2, window_bounds = array<i64: 1, 128>}, {pipeline_mode = #tpu.pipeline_mode<synchronous>, transform_indices = @transform_3, window_bounds = array<i64: 128, 128>}, {pipeline_mode = #tpu.pipeline_mode<synchronous>, transform_indices = @transform_4, window_bounds = array<i64: 128, 128>}, {pipeline_mode = #tpu.pipeline_mode<synchronous>, transform_indices = @transform_5, window_bounds = array<i64: 1, 128>}, {pipeline_mode = #tpu.pipeline_mode<synchronous>, transform_indices = @transform_6, window_bounds = array<i64: 128, 128>}, {pipeline_mode = #tpu.pipeline_mode<synchronous>, transform_indices = @transform_7, window_bounds = array<i64: 1, 128>}, {transform_indices = @transform_8, window_bounds = array<i64: 128, 128>}]} {
    %c128_i32 = arith.constant 128 : i32
    %0 = arith.muli %arg1, %c128_i32 : i32
    %1 = tpu.assume_multiple %0, 128 : i32
    %c0 = arith.constant 0 : index
    %c0_0 = arith.constant 0 : index
    %2 = vector.load %arg2[%c0, %c0_0] : memref<128x128xbf16, #tpu.memory_space<vmem>>, vector<128x128xbf16>
    %3 = arith.extf %2 : vector<128x128xbf16> to vector<128x128xf32>
    %c0_1 = arith.constant 0 : index
    %c0_2 = arith.constant 0 : index
    %4 = vector.load %arg3[%c0_1, %c0_2] : memref<128x1xf32, #tpu.memory_space<vmem>>, vector<128x1xf32>
    %5 = vector.broadcast %4 : vector<128x1xf32> to vector<128x128xf32>
    %6 = arith.mulf %3, %5 : vector<128x128xf32>
    %c0_3 = arith.constant 0 : index
    %c0_4 = arith.constant 0 : index
    %7 = vector.load %arg4[%c0_3, %c0_4] : memref<1x128xf32, #tpu.memory_space<vmem>>, vector<1x128xf32>
    %8 = vector.broadcast %7 : vector<1x128xf32> to vector<128x128xf32>
    %9 = arith.mulf %6, %8 : vector<128x128xf32>
    %10 = arith.truncf %9 : vector<128x128xf32> to vector<128x128xbf16>
    %c0_i32 = arith.constant 0 : i32
    %11 = arith.cmpi eq, %arg0, %c0_i32 : i32
    %12 = arith.extui %11 : i1 to i32
    %c0_i32_5 = arith.constant 0 : i32
    %13 = arith.cmpi ne, %12, %c0_i32_5 : i32
    scf.if %13 {
      %c0_7 = arith.constant 0 : index
      %c0_8 = arith.constant 0 : index
      %17 = vector.load %arg5[%c0_7, %c0_8] : memref<128x128xbf16, #tpu.memory_space<vmem>>, vector<128x128xbf16>
      %cst = arith.constant dense<0.000000e+00> : vector<128x128xf32>
      %18 = tpu.matmul %10, %17, %cst {dimension_numbers = #tpu.dot_dimension_numbers<[1], [0], [0], [1], [0, 0, 1, 1], [], []>} : vector<128x128xbf16>, vector<128x128xbf16>, vector<128x128xf32> -> vector<128x128xf32>
      %19 = arith.truncf %18 : vector<128x128xf32> to vector<128x128xbf16>
      %c0_9 = arith.constant 0 : index
      %c0_10 = arith.constant 0 : index
      %20 = vector.load %arg6[%c0_9, %c0_10] : memref<128x128xbf16, #tpu.memory_space<vmem>>, vector<128x128xbf16>
      %cst_11 = arith.constant dense<0.000000e+00> : vector<128x128xf32>
      %21 = tpu.matmul %19, %20, %cst_11 {dimension_numbers = #tpu.dot_dimension_numbers<[1], [0], [0], [1], [0, 0, 1, 1], [], []>} : vector<128x128xbf16>, vector<128x128xbf16>, vector<128x128xf32> -> vector<128x128xf32>
      %c0_12 = arith.constant 0 : index
      %c0_13 = arith.constant 0 : index
      %22 = vector.load %arg7[%c0_12, %c0_13] : memref<1x128xf32, #tpu.memory_space<vmem>>, vector<1x128xf32>
      %23 = vector.broadcast %22 : vector<1x128xf32> to vector<128x128xf32>
      %24 = arith.addf %21, %23 : vector<128x128xf32>
      %cst_14 = arith.constant 0.000000e+00 : f32
      %25 = vector.broadcast %cst_14 : f32 to vector<128x128xf32>
      %26 = arith.maximumf %24, %25 : vector<128x128xf32>
      %27 = arith.truncf %26 : vector<128x128xf32> to vector<128x128xbf16>
      %28 = arith.index_cast %1 : i32 to index
      %c0_15 = arith.constant 0 : index
      %29 = vector.load %arg11[%28, %c0_15] : memref<128x128xbf16, #tpu.memory_space<vmem>>, vector<128x128xbf16>
      tpu.vector_store %arg11[%28, %c0_15], %27 {strides = array<i32>} : memref<128x128xbf16, #tpu.memory_space<vmem>>, vector<128x128xbf16>,
    } else {
    }
    %c1_i32 = arith.constant 1 : i32
    %14 = arith.cmpi eq, %arg0, %c1_i32 : i32
    %15 = arith.extui %14 : i1 to i32
    %c0_i32_6 = arith.constant 0 : i32
    %16 = arith.cmpi ne, %15, %c0_i32_6 : i32
    scf.if %16 {
      %c0_7 = arith.constant 0 : index
      %c0_8 = arith.constant 0 : index
      %17 = vector.load %arg11[%c0_7, %c0_8] : memref<128x128xbf16, #tpu.memory_space<vmem>>, vector<128x128xbf16>
      %cst = arith.constant dense<0.000000e+00> : vector<128x128xf32>
      %18 = tpu.matmul %10, %17, %cst {dimension_numbers = #tpu.dot_dimension_numbers<[1], [0], [0], [1], [0, 0, 1, 1], [], []>} : vector<128x128xbf16>, vector<128x128xbf16>, vector<128x128xf32> -> vector<128x128xf32>
      %19 = arith.truncf %18 : vector<128x128xf32> to vector<128x128xbf16>
      %c0_9 = arith.constant 0 : index
      %c0_10 = arith.constant 0 : index
      %20 = vector.load %arg8[%c0_9, %c0_10] : memref<128x128xbf16, #tpu.memory_space<vmem>>, vector<128x128xbf16>
      %cst_11 = arith.constant dense<0.000000e+00> : vector<128x128xf32>
      %21 = tpu.matmul %19, %20, %cst_11 {dimension_numbers = #tpu.dot_dimension_numbers<[1], [0], [0], [1], [0, 0, 1, 1], [], []>} : vector<128x128xbf16>, vector<128x128xbf16>, vector<128x128xf32> -> vector<128x128xf32>
      %c0_12 = arith.constant 0 : index
      %c0_13 = arith.constant 0 : index
      %22 = vector.load %arg9[%c0_12, %c0_13] : memref<1x128xf32, #tpu.memory_space<vmem>>, vector<1x128xf32>
      %23 = vector.broadcast %22 : vector<1x128xf32> to vector<128x128xf32>
      %24 = arith.addf %21, %23 : vector<128x128xf32>
      %c0_14 = arith.constant 0 : index
      %c0_15 = arith.constant 0 : index
      %25 = vector.load %arg10[%c0_14, %c0_15] : memref<128x128xf32, #tpu.memory_space<vmem>>, vector<128x128xf32>
      tpu.vector_store %arg10[%c0_14, %c0_15], %24 {strides = array<i32>} : memref<128x128xf32, #tpu.memory_space<vmem>>, vector<128x128xf32>,
    } else {
    }
    return
  }
  func.func @transform_0(%arg0: i32, %arg1: i32) -> (i32, i32) {
    %c0_i32 = arith.constant 0 : i32
    %c0_i32_0 = arith.constant 0 : i32
    return %arg1, %c0_i32 : i32, i32
  }
  func.func @transform_1(%arg0: i32, %arg1: i32) -> (i32, i32) {
    %c0_i32 = arith.constant 0 : i32
    %c0_i32_0 = arith.constant 0 : i32
    return %arg1, %c0_i32 : i32, i32
  }
  func.func @transform_2(%arg0: i32, %arg1: i32) -> (i32, i32) {
    %c0_i32 = arith.constant 0 : i32
    %c0_i32_0 = arith.constant 0 : i32
    %c0_i32_1 = arith.constant 0 : i32
    return %c0_i32, %c0_i32_0 : i32, i32
  }
  func.func @transform_3(%arg0: i32, %arg1: i32) -> (i32, i32) {
    %c0_i32 = arith.constant 0 : i32
    %c0_i32_0 = arith.constant 0 : i32
    %c0_i32_1 = arith.constant 0 : i32
    return %c0_i32, %c0_i32_0 : i32, i32
  }
  func.func @transform_4(%arg0: i32, %arg1: i32) -> (i32, i32) {
    %c0_i32 = arith.constant 0 : i32
    %c0_i32_0 = arith.constant 0 : i32
    %c0_i32_1 = arith.constant 0 : i32
    return %c0_i32, %c0_i32_0 : i32, i32
  }
  func.func @transform_5(%arg0: i32, %arg1: i32) -> (i32, i32) {
    %c0_i32 = arith.constant 0 : i32
    %c0_i32_0 = arith.constant 0 : i32
    %c0_i32_1 = arith.constant 0 : i32
    return %c0_i32, %c0_i32_0 : i32, i32
  }
  func.func @transform_6(%arg0: i32, %arg1: i32) -> (i32, i32) {
    %c0_i32 = arith.constant 0 : i32
    %c0_i32_0 = arith.constant 0 : i32
    %c0_i32_1 = arith.constant 0 : i32
    return %c0_i32, %c0_i32_0 : i32, i32
  }
  func.func @transform_7(%arg0: i32, %arg1: i32) -> (i32, i32) {
    %c0_i32 = arith.constant 0 : i32
    %c0_i32_0 = arith.constant 0 : i32
    %c0_i32_1 = arith.constant 0 : i32
    return %c0_i32, %c0_i32_0 : i32, i32
  }
  func.func @transform_8(%arg0: i32, %arg1: i32) -> (i32, i32) {
    %c0_i32 = arith.constant 0 : i32
    %c0_i32_0 = arith.constant 0 : i32
    return %arg1, %c0_i32 : i32, i32
  }
}

</mosaic_0001>

<llo_original>
// kernel: tpu_custom_call.1
$region0: #{tpu_custom_call.1}
  #allocation0 [shape = 'u32[]', space=smem, size = 0x4, offset = 0x4, fixed_abs, tag = 'smem constant byte address 0x4 - core index']
  #allocation1 [shape = 'u32[144,128]{1,0:T(1,128)}', space=vmem, size = 0x12000, scoped, tag = 'internal scratch']
  #allocation2 [shape = 'bf16[128,128]{1,0:T(16,128)(2,1)}', space=vmem, size = 0x8000, scoped, tag = 'scratch operand']
  %s0 = inlined_call_operand.vmem [shape: bf16[128,128], index: 0, kind: input, shape index: {}]
  %s1 = inlined_call_operand.vmem [shape: f32[128,1], index: 1, kind: input, shape index: {}]
  %s2 = inlined_call_operand.vmem [shape: f32[1,128], index: 2, kind: input, shape index: {}]
  %s3 = inlined_call_operand.vmem [shape: bf16[128,128], index: 3, kind: input, shape index: {}]
  %s4 = inlined_call_operand.hbm [shape: bf16[128,128], index: 4, kind: input, shape index: {}]
  %s5 = inlined_call_operand.vmem [shape: f32[1,128], index: 5, kind: input, shape index: {}]
  %s6 = inlined_call_operand.hbm [shape: bf16[128,128], index: 6, kind: input, shape index: {}]
  %s7 = inlined_call_operand.vmem [shape: f32[1,128], index: 7, kind: input, shape index: {}]
  %s8 = inlined_call_operand.hbm [shape: f32[128,128], index: 8, kind: output, shape index: {}]
  %s9 = sld [smem:[#allocation0]]
  $region81: #{tpu_custom_call.1} parent=0
    _
  %s11 = ssub.s32 1, %s9
  %s12 = scalar_select 0, %s11, %s9
  $region1: #{tpu_custom_call.1} parent=0
    #allocation3 [shape = 'u8[32768]{0}', space=vmem, size = 0x8000, scoped, tag = 'input window, operand 4, single buffered']
    #allocation4 [shape = 's32[2]{0}', space=sflag, size = 0x8, scoped, tag = 'scoped memory for tpu_custom_call.1']
    #allocation5 [shape = 's32[2]{0}', space=sflag, size = 0x8, scoped, tag = 'scoped memory for tpu_custom_call.1']
    #allocation6 [shape = 'u8[32768]{0}', space=vmem, size = 0x8000, scoped, tag = 'input window, operand 6, single buffered']
    #allocation7 [shape = 's32[1]{0}', space=sflag, size = 0x4, scoped, tag = 'scoped memory for tpu_custom_call.1']
    #allocation8 [shape = 'u8[65536]{0}', space=vmem, size = 0x10000, scoped, tag = 'output window, operand 0, single buffered']
    %13 = vsyncpa [#allocation4], 0
    %14 = vsyncpa [#allocation7], 0
    %15 = vsyncpa [#allocation5], 0
    loop: start=0, step=1, limit=4
    $region2: #{tpu_custom_call.1} parent=1 // loop_pre_header
      _
    $region3: #{tpu_custom_call.1} parent=1 // loop_header
      %s17 = sphi 0, %s21
      %p18 = scmp.ge.s32.totalorder %s17, 4
      %s24 = sphi 0, %s36
      %s25 = sphi 0, %s32
      %s26 = sphi 0, %s24
      %s27 = sphi 0, %s25
      %s28 = sphi 0, %s26
      %s29 = sphi 0, %s27
      %s39 = sphi 0, %s41
      %s42 = sphi 0, %s39
      %s43 = sphi 0, %s42
      %s59 = sphi 0, %s43
      %s65 = sphi 0, %s67
      %s68 = sphi 0, %s65
      %s69 = sphi 0, %s68
      %s85 = sphi 0, %s69
      %s89 = sphi 0, %s89
      %s91 = sphi 0, %s89
      %s92 = sphi 0, %s91
      %s106 = sphi 0, %s92
      %s110 = sphi 0, %s110
      %s112 = sphi 0, %s110
      %s113 = sphi 0, %s112
      %s127 = sphi 0, %s113
      %s131 = sphi 0, %s131
      %s133 = sphi 0, %s131
      %s134 = sphi 0, %s133
      %s148 = sphi 0, %s134
      %s152 = sphi 0, %s152
      %s154 = sphi 0, %s152
      %s155 = sphi 0, %s154
      %s169 = sphi 0, %s155
      %s173 = sphi 0, %s173
      %s175 = sphi 0, %s173
      %s176 = sphi 0, %s175
      %s190 = sphi 0, %s176
      %s194 = sphi 0, %s194
      %s196 = sphi 0, %s194
      %s197 = sphi 0, %s196
      %s211 = sphi 0, %s197
      %s217 = sphi 0, %s219
      %s220 = sphi 0, %s217
      %s221 = sphi 0, %s220
      %s237 = sphi 0, %s221
    $region4: #{tpu_custom_call.1} parent=1 // loop_header_branch
      %20 = sbr.rel (%p18) target = $region8
    $region5: #{tpu_custom_call.1} parent=1 // loop_body
      %s22 = ssub.s32 %s17, 1
      %s23 = ssub.s32 %s17, 2
      %s30 = sadd.s32 1, %s25
      %p31 = scmp.ge.s32.totalorder %s30, 1
      %s32 = scalar_select %p31, 0, %s30
      %s33 = sadd.s32 1, %s24
      %s34 = scalar_select %p31, %s33, %s24
      %p35 = scmp.ge.s32.totalorder %s34, 2
      %s36 = scalar_select %p35, 0, %s34
      %s37 = ssub.s32 %s25, %s32
      %p38 = scmp.eq.s32.totalorder %s37, 0
      %s40 = sadd.s32 %s39, 1
      %s41 = scalar_select %p38, %s39, %s40
      %p44 = pneg %p38
      %p45 = scmp.eq.s32.totalorder %s17, 1
      %p46 = por %p44, %p45
      %p47 = scmp.ne.s32.totalorder %s39, %s42
      %p48 = scmp.eq.s32.totalorder %s17, 0
      %p49 = por %p47, %p48
      %p50 = scmp.ne.s32.totalorder %s39, %s42
      %p51 = scmp.eq.s32.totalorder %s22, 1
      %p52 = por %p50, %p51
      %p53 = scmp.ne.s32.totalorder %s42, %s43
      %p54 = scmp.eq.s32.totalorder %s22, 0
      %p55 = por %p53, %p54
      %p56 = scmp.ne.s32.totalorder %s42, %s43
      %p57 = scmp.eq.s32.totalorder %s23, 1
      %p58 = por %p56, %p57
      %p60 = scmp.ne.s32.totalorder %s43, %s59
      %p61 = scmp.eq.s32.totalorder %s23, 0
      %p62 = por %p60, %p61
      %s63 = ssub.s32 %s25, %s32
      %p64 = scmp.eq.s32.totalorder %s63, 0
      %s66 = sadd.s32 %s65, 1
      %s67 = scalar_select %p64, %s65, %s66
      %p70 = pneg %p64
      %p71 = scmp.eq.s32.totalorder %s17, 1
      %p72 = por %p70, %p71
      %p73 = scmp.ne.s32.totalorder %s65, %s68
      %p74 = scmp.eq.s32.totalorder %s17, 0
      %p75 = por %p73, %p74
      %p76 = scmp.ne.s32.totalorder %s65, %s68
      %p77 = scmp.eq.s32.totalorder %s22, 1
      %p78 = por %p76, %p77
      %p79 = scmp.ne.s32.totalorder %s68, %s69
      %p80 = scmp.eq.s32.totalorder %s22, 0
      %p81 = por %p79, %p80
      %p82 = scmp.ne.s32.totalorder %s68, %s69
      %p83 = scmp.eq.s32.totalorder %s23, 1
      %p84 = por %p82, %p83
      %p86 = scmp.ne.s32.totalorder %s69, %s85
      %p87 = scmp.eq.s32.totalorder %s23, 0
      %p88 = por %p86, %p87
      %s90 = sadd.s32 %s89, 1
      %p93 = scmp.eq.s32.totalorder %s17, 1
      %p94 = scmp.ne.s32.totalorder %s89, %s91
      %p95 = scmp.eq.s32.totalorder %s17, 0
      %p96 = por %p94, %p95
      %p97 = scmp.ne.s32.totalorder %s89, %s91
      %p98 = scmp.eq.s32.totalorder %s22, 1
      %p99 = por %p97, %p98
      %p100 = scmp.ne.s32.totalorder %s91, %s92
      %p101 = scmp.eq.s32.totalorder %s22, 0
      %p102 = por %p100, %p101
      %p103 = scmp.ne.s32.totalorder %s91, %s92
      %p104 = scmp.eq.s32.totalorder %s23, 1
      %p105 = por %p103, %p104
      %p107 = scmp.ne.s32.totalorder %s92, %s106
      %p108 = scmp.eq.s32.totalorder %s23, 0
      %p109 = por %p107, %p108
      %s111 = sadd.s32 %s110, 1
      %p114 = scmp.eq.s32.totalorder %s17, 1
      %p115 = scmp.ne.s32.totalorder %s110, %s112
      %p116 = scmp.eq.s32.totalorder %s17, 0
      %p117 = por %p115, %p116
      %p118 = scmp.ne.s32.totalorder %s110, %s112
      %p119 = scmp.eq.s32.totalorder %s22, 1
      %p120 = por %p118, %p119
      %p121 = scmp.ne.s32.totalorder %s112, %s113
      %p122 = scmp.eq.s32.totalorder %s22, 0
      %p123 = por %p121, %p122
      %p124 = scmp.ne.s32.totalorder %s112, %s113
      %p125 = scmp.eq.s32.totalorder %s23, 1
      %p126 = por %p124, %p125
      %p128 = scmp.ne.s32.totalorder %s113, %s127
      %p129 = scmp.eq.s32.totalorder %s23, 0
      %p130 = por %p128, %p129
      %s132 = sadd.s32 %s131, 1
      %p135 = scmp.eq.s32.totalorder %s17, 1
      %p136 = scmp.ne.s32.totalorder %s131, %s133
      %p137 = scmp.eq.s32.totalorder %s17, 0
      %p138 = por %p136, %p137
      %p139 = scmp.ne.s32.totalorder %s131, %s133
      %p140 = scmp.eq.s32.totalorder %s22, 1
      %p141 = por %p139, %p140
      %p142 = scmp.ne.s32.totalorder %s133, %s134
      %p143 = scmp.eq.s32.totalorder %s22, 0
      %p144 = por %p142, %p143
      %p145 = scmp.ne.s32.totalorder %s133, %s134
      %p146 = scmp.eq.s32.totalorder %s23, 1
      %p147 = por %p145, %p146
      %p149 = scmp.ne.s32.totalorder %s134, %s148
      %p150 = scmp.eq.s32.totalorder %s23, 0
      %p151 = por %p149, %p150
      %s153 = sadd.s32 %s152, 1
      %p156 = scmp.eq.s32.totalorder %s17, 1
      %p157 = scmp.ne.s32.totalorder %s152, %s154
      %p158 = scmp.eq.s32.totalorder %s17, 0
      %p159 = por %p157, %p158
      %p160 = scmp.ne.s32.totalorder %s152, %s154
      %p161 = scmp.eq.s32.totalorder %s22, 1
      %p162 = por %p160, %p161
      %p163 = scmp.ne.s32.totalorder %s154, %s155
      %p164 = scmp.eq.s32.totalorder %s22, 0
      %p165 = por %p163, %p164
      %p166 = scmp.ne.s32.totalorder %s154, %s155
      %p167 = scmp.eq.s32.totalorder %s23, 1
      %p168 = por %p166, %p167
      %p170 = scmp.ne.s32.totalorder %s155, %s169
      %p171 = scmp.eq.s32.totalorder %s23, 0
      %p172 = por %p170, %p171
      %s174 = sadd.s32 %s173, 1
      %p177 = scmp.eq.s32.totalorder %s17, 1
      %p178 = scmp.ne.s32.totalorder %s173, %s175
      %p179 = scmp.eq.s32.totalorder %s17, 0
      %p180 = por %p178, %p179
      %p181 = scmp.ne.s32.totalorder %s173, %s175
      %p182 = scmp.eq.s32.totalorder %s22, 1
      %p183 = por %p181, %p182
      %p184 = scmp.ne.s32.totalorder %s175, %s176
      %p185 = scmp.eq.s32.totalorder %s22, 0
      %p186 = por %p184, %p185
      %p187 = scmp.ne.s32.totalorder %s175, %s176
      %p188 = scmp.eq.s32.totalorder %s23, 1
      %p189 = por %p187, %p188
      %p191 = scmp.ne.s32.totalorder %s176, %s190
      %p192 = scmp.eq.s32.totalorder %s23, 0
      %p193 = por %p191, %p192
      %s195 = sadd.s32 %s194, 1
      %p198 = scmp.eq.s32.totalorder %s17, 1
      %p199 = scmp.ne.s32.totalorder %s194, %s196
      %p200 = scmp.eq.s32.totalorder %s17, 0
      %p201 = por %p199, %p200
      %p202 = scmp.ne.s32.totalorder %s194, %s196
      %p203 = scmp.eq.s32.totalorder %s22, 1
      %p204 = por %p202, %p203
      %p205 = scmp.ne.s32.totalorder %s196, %s197
      %p206 = scmp.eq.s32.totalorder %s22, 0
      %p207 = por %p205, %p206
      %p208 = scmp.ne.s32.totalorder %s196, %s197
      %p209 = scmp.eq.s32.totalorder %s23, 1
      %p210 = por %p208, %p209
      %p212 = scmp.ne.s32.totalorder %s197, %s211
      %p213 = scmp.eq.s32.totalorder %s23, 0
      %p214 = por %p212, %p213
      %s215 = ssub.s32 %s25, %s32
      %p216 = scmp.eq.s32.totalorder %s215, 0
      %s218 = sadd.s32 %s217, 1
      %s219 = scalar_select %p216, %s217, %s218
      %p222 = pneg %p216
      %p223 = scmp.eq.s32.totalorder %s17, 1
      %p224 = por %p222, %p223
      %p225 = scmp.ne.s32.totalorder %s217, %s220
      %p226 = scmp.eq.s32.totalorder %s17, 0
      %p227 = por %p225, %p226
      %p228 = scmp.ne.s32.totalorder %s217, %s220
      %p229 = scmp.eq.s32.totalorder %s22, 1
      %p230 = por %p228, %p229
      %p231 = scmp.ne.s32.totalorder %s220, %s221
      %p232 = scmp.eq.s32.totalorder %s22, 0
      %p233 = por %p231, %p232
      %p234 = scmp.ne.s32.totalorder %s220, %s221
      %p235 = scmp.eq.s32.totalorder %s23, 1
      %p236 = por %p234, %p235
      %p238 = scmp.ne.s32.totalorder %s221, %s237
      %p239 = scmp.eq.s32.totalorder %s23, 0
      %p240 = por %p238, %p239
      %p241 = scmp.le.s32.totalorder 1, %s17
      %p242 = scmp.lt.s32.totalorder %s17, 3
      %p243 = pnand %p241, %p242
      %p244 = pneg %p243
      // Predicated region
      $region9: #{tpu_custom_call.1} parent=5 // pred_check
        _
      $region10: #{tpu_custom_call.1} parent=5 // pred_check_branch
        %246 = sbr.rel (%p243) target = $region12
      $region11: #{tpu_custom_call.1} parent=5 // pred_region
        %s247 = ssub.s32 %s17, 1
        // Predicated region
        $region13: #{tpu_custom_call.1} parent=11 // pred_check
          %p248 = pneg %p55
        $region14: #{tpu_custom_call.1} parent=11 // pred_check_branch
          %250 = sbr.rel (%p248) target = $region16
        $region15: #{tpu_custom_call.1} parent=11 // pred_region
          %s251 = smul.u32 16, %s27
          %p252 = scmp.lt.s32.totalorder %s251, 15
          %s253 = scalar_select %p252, %s251, 15
          %s254 = smul.addr %s253, 4
          %s255 = scalar_lea.vmem %s0, %s254
          %s256 = smul.u32 16, %s27
        $region16: #{tpu_custom_call.1} parent=11 // pred_fallthru
          _
        // Predicated region
        $region17: #{tpu_custom_call.1} parent=11 // pred_check
          %p257 = pneg %p81
        $region18: #{tpu_custom_call.1} parent=11 // pred_check_branch
          %259 = sbr.rel (%p257) target = $region20
        $region19: #{tpu_custom_call.1} parent=11 // pred_region
          %s260 = smul.u32 16, %s27
          %p261 = scmp.lt.s32.totalorder %s260, 15
          %s262 = scalar_select %p261, %s260, 15
          %s263 = smul.addr %s262, 8
          %s264 = scalar_lea.vmem %s1, %s263
          %s265 = smul.u32 16, %s27
        $region20: #{tpu_custom_call.1} parent=11 // pred_fallthru
          _
        // Predicated region
        $region21: #{tpu_custom_call.1} parent=11 // pred_check
          %p266 = pneg %p102
        $region22: #{tpu_custom_call.1} parent=11 // pred_check_branch
          %268 = sbr.rel (%p266) target = $region24
        $region23: #{tpu_custom_call.1} parent=11 // pred_region
          _
        $region24: #{tpu_custom_call.1} parent=11 // pred_fallthru
          _
        // Predicated region
        $region25: #{tpu_custom_call.1} parent=11 // pred_check
          %p269 = pneg %p123
        $region26: #{tpu_custom_call.1} parent=11 // pred_check_branch
          %271 = sbr.rel (%p269) target = $region28
        $region27: #{tpu_custom_call.1} parent=11 // pred_region
          _
        $region28: #{tpu_custom_call.1} parent=11 // pred_fallthru
          _
        // Predicated region
        $region29: #{tpu_custom_call.1} parent=11 // pred_check
          %p272 = pneg %p144
        $region30: #{tpu_custom_call.1} parent=11 // pred_check_branch
          %274 = sbr.rel (%p272) target = $region32
        $region31: #{tpu_custom_call.1} parent=11 // pred_region
          %s276 = ssub.s32 1024, 1024
          %277 = vsyncadd [#allocation4], %s276
          %s278 = sshll.u32 [#allocation3], 4
          %s279 = int_to_ptr.vmem [resolvable:$true] %s278
          %284 = dma.hbm_to_vmem [thread:$0]  %s4, 1024, %s279, [#allocation4], 64, 64, 4
        $region32: #{tpu_custom_call.1} parent=11 // pred_fallthru
          _
        // Predicated region
        $region33: #{tpu_custom_call.1} parent=11 // pred_check
          %p285 = pneg %p165
        $region34: #{tpu_custom_call.1} parent=11 // pred_check_branch
          %287 = sbr.rel (%p285) target = $region36
        $region35: #{tpu_custom_call.1} parent=11 // pred_region
          _
        $region36: #{tpu_custom_call.1} parent=11 // pred_fallthru
          _
        // Predicated region
        $region37: #{tpu_custom_call.1} parent=11 // pred_check
          %p288 = pneg %p186
        $region38: #{tpu_custom_call.1} parent=11 // pred_check_branch
          %290 = sbr.rel (%p288) target = $region40
        $region39: #{tpu_custom_call.1} parent=11 // pred_region
          %s292 = ssub.s32 1024, 1024
          %293 = vsyncadd [#allocation7], %s292
          %s294 = sshll.u32 [#allocation6], 4
          %s295 = int_to_ptr.vmem [resolvable:$true] %s294
          %300 = dma.hbm_to_vmem [thread:$0]  %s6, 1024, %s295, [#allocation7], 64, 64, 4
        $region40: #{tpu_custom_call.1} parent=11 // pred_fallthru
          _
        // Predicated region
        $region41: #{tpu_custom_call.1} parent=11 // pred_check
          %p301 = pneg %p207
        $region42: #{tpu_custom_call.1} parent=11 // pred_check_branch
          %303 = sbr.rel (%p301) target = $region44
        $region43: #{tpu_custom_call.1} parent=11 // pred_region
          _
        $region44: #{tpu_custom_call.1} parent=11 // pred_fallthru
          _
      $region12: #{tpu_custom_call.1} parent=5 // pred_fallthru
        _
      %p304 = scmp.lt.s32.totalorder %s17, 2
      // Predicated region
      $region45: #{tpu_custom_call.1} parent=5 // pred_check
        %p305 = pneg %p304
      $region46: #{tpu_custom_call.1} parent=5 // pred_check_branch
        %307 = sbr.rel (%p305) target = $region48
      $region47: #{tpu_custom_call.1} parent=5 // pred_region
        _
      $region48: #{tpu_custom_call.1} parent=5 // pred_fallthru
        _
      %p308 = scmp.le.s32.totalorder 1, %s17
      %p309 = scmp.lt.s32.totalorder %s17, 3
      %p310 = pnand %p308, %p309
      %p311 = pneg %p310
      // Predicated region
      $region49: #{tpu_custom_call.1} parent=5 // pred_check
        _
      $region50: #{tpu_custom_call.1} parent=5 // pred_check_branch
        %313 = sbr.rel (%p310) target = $region52
      $region51: #{tpu_custom_call.1} parent=5 // pred_region
        %s314 = ssub.s32 %s17, 1
        // Predicated region
        $region53: #{tpu_custom_call.1} parent=51 // pred_check
          %p315 = pneg %p144
        $region54: #{tpu_custom_call.1} parent=51 // pred_check_branch
          %317 = sbr.rel (%p315) target = $region56
        $region55: #{tpu_custom_call.1} parent=51 // pred_region
          %318 = dma.done [#allocation4], 1024
        $region56: #{tpu_custom_call.1} parent=51 // pred_fallthru
          _
        // Predicated region
        $region57: #{tpu_custom_call.1} parent=51 // pred_check
          %p319 = pneg %p186
        $region58: #{tpu_custom_call.1} parent=51 // pred_check_branch
          %321 = sbr.rel (%p319) target = $region60
        $region59: #{tpu_custom_call.1} parent=51 // pred_region
          %322 = dma.done [#allocation7], 1024
        $region60: #{tpu_custom_call.1} parent=51 // pred_fallthru
          _
        %s323 = smul.u32 16, %s27
        %p324 = scmp.lt.s32.totalorder %s323, 15
        %s325 = scalar_select %p324, %s323, 15
        %s326 = smul.addr %s325, 4
        %s327 = scalar_lea.vmem %s0, %s326
        %p328 = pneg %p55
        %p329 = pneg %p52
        %s330 = smul.u32 16, %s27
        %p331 = scmp.lt.s32.totalorder %s330, 15
        %s332 = scalar_select %p331, %s330, 15
        %s333 = smul.addr %s332, 8
        %s334 = scalar_lea.vmem %s1, %s333
        %p335 = pneg %p81
        %p336 = pneg %p78
        %p337 = pneg %p102
        %p338 = pneg %p99
        %p339 = pneg %p123
        %p340 = pneg %p120
        %p341 = pneg %p144
        %p342 = pneg %p141
        %p343 = pneg %p165
        %p344 = pneg %p162
        %p345 = pneg %p186
        %p346 = pneg %p183
        %p347 = pneg %p207
        %p348 = pneg %p204
        %p349 = pneg %p233
        %p350 = pneg %p230
        %s351 = smul.u32 16, %s27
        %p352 = scmp.lt.s32.totalorder %s351, 15
        %s353 = scalar_select %p352, %s351, 15
        %s354 = smul.addr %s353, 4
        %s355 = scalar_lea.vmem %s0, %s354
        %s356 = smul.u32 16, %s27
        %s357 = smul.u32 16, %s27
        %p358 = scmp.lt.s32.totalorder %s357, 15
        %s359 = scalar_select %p358, %s357, 15
        %s360 = smul.addr %s359, 8
        %s361 = scalar_lea.vmem %s1, %s360
        %s362 = smul.u32 16, %s27
        %s363 = smul.u32 16, %s27
        %s365 = smul.u32 %s27, 128
        %v366 = vld [vmem:[%s355] sm:$0xf]
        %v367 = vld [vmem:[%s355 + $0x4] sm:$0xf]
        %v368 = vld [vmem:[%s355 + $0x8] sm:$0xf]
        %v369 = vld [vmem:[%s355 + $0xc] sm:$0xf]
        %v370 = vld [vmem:[%s355 + $0x10] sm:$0xf]
        %v371 = vld [vmem:[%s355 + $0x14] sm:$0xf]
        %v372 = vld [vmem:[%s355 + $0x18] sm:$0xf]
        %v373 = vld [vmem:[%s355 + $0x1c] sm:$0xf]
        %v374 = vld [vmem:[%s355 + $0x20] sm:$0xf]
        %v375 = vld [vmem:[%s355 + $0x24] sm:$0xf]
        %v376 = vld [vmem:[%s355 + $0x28] sm:$0xf]
        %v377 = vld [vmem:[%s355 + $0x2c] sm:$0xf]
        %v378 = vld [vmem:[%s355 + $0x30] sm:$0xf]
        %v379 = vld [vmem:[%s355 + $0x34] sm:$0xf]
        %v380 = vld [vmem:[%s355 + $0x38] sm:$0xf]
        %v381 = vld [vmem:[%s355 + $0x3c] sm:$0xf]
        %v382 = vunpack.c.l.bf16 %v366
        %v383 = vunpack.c.l.bf16 %v367
        %v384 = vunpack.c.l.bf16 %v368
        %v385 = vunpack.c.l.bf16 %v369
        %v386 = vunpack.c.l.bf16 %v370
        %v387 = vunpack.c.l.bf16 %v371
        %v388 = vunpack.c.l.bf16 %v372
        %v389 = vunpack.c.l.bf16 %v373
        %v390 = vunpack.c.l.bf16 %v374
        %v391 = vunpack.c.l.bf16 %v375
        %v392 = vunpack.c.l.bf16 %v376
        %v393 = vunpack.c.l.bf16 %v377
        %v394 = vunpack.c.l.bf16 %v378
        %v395 = vunpack.c.l.bf16 %v379
        %v396 = vunpack.c.l.bf16 %v380
        %v397 = vunpack.c.l.bf16 %v381
        %v398 = vld [vmem:[%s361] sm:$0xff]
        %v399 = vld [vmem:[%s361 + $0x8] sm:$0xff]
        %v400 = vld [vmem:[%s361 + $0x10] sm:$0xff]
        %v401 = vld [vmem:[%s361 + $0x18] sm:$0xff]
        %v402 = vld [vmem:[%s361 + $0x20] sm:$0xff]
        %v403 = vld [vmem:[%s361 + $0x28] sm:$0xff]
        %v404 = vld [vmem:[%s361 + $0x30] sm:$0xff]
        %v405 = vld [vmem:[%s361 + $0x38] sm:$0xff]
        %v406 = vld [vmem:[%s361 + $0x40] sm:$0xff]
        %v407 = vld [vmem:[%s361 + $0x48] sm:$0xff]
        %v408 = vld [vmem:[%s361 + $0x50] sm:$0xff]
        %v409 = vld [vmem:[%s361 + $0x58] sm:$0xff]
        %v410 = vld [vmem:[%s361 + $0x60] sm:$0xff]
        %v411 = vld [vmem:[%s361 + $0x68] sm:$0xff]
        %v412 = vld [vmem:[%s361 + $0x70] sm:$0xff]
        %v413 = vld [vmem:[%s361 + $0x78] sm:$0xff]
        %415 = vset.pattern.permute.xlu0 0
        %416 = vperm.xlu0 %415, %v398
        %v417 = vpop.permute.xlu0 %416
        %420 = vset.pattern.permute.xlu0 0
        %421 = vperm.xlu0 %420, %v399
        %v422 = vpop.permute.xlu0 %421
        %425 = vset.pattern.permute.xlu0 0
        %426 = vperm.xlu0 %425, %v400
        %v427 = vpop.permute.xlu0 %426
        %430 = vset.pattern.permute.xlu0 0
        %431 = vperm.xlu0 %430, %v401
        %v432 = vpop.permute.xlu0 %431
        %435 = vset.pattern.permute.xlu0 0
        %436 = vperm.xlu0 %435, %v402
        %v437 = vpop.permute.xlu0 %436
        %440 = vset.pattern.permute.xlu0 0
        %441 = vperm.xlu0 %440, %v403
        %v442 = vpop.permute.xlu0 %441
        %445 = vset.pattern.permute.xlu0 0
        %446 = vperm.xlu0 %445, %v404
        %v447 = vpop.permute.xlu0 %446
        %450 = vset.pattern.permute.xlu0 0
        %451 = vperm.xlu0 %450, %v405
        %v452 = vpop.permute.xlu0 %451
        %455 = vset.pattern.permute.xlu0 0
        %456 = vperm.xlu0 %455, %v406
        %v457 = vpop.permute.xlu0 %456
        %460 = vset.pattern.permute.xlu0 0
        %461 = vperm.xlu0 %460, %v407
        %v462 = vpop.permute.xlu0 %461
        %465 = vset.pattern.permute.xlu0 0
        %466 = vperm.xlu0 %465, %v408
        %v467 = vpop.permute.xlu0 %466
        %470 = vset.pattern.permute.xlu0 0
        %471 = vperm.xlu0 %470, %v409
        %v472 = vpop.permute.xlu0 %471
        %475 = vset.pattern.permute.xlu0 0
        %476 = vperm.xlu0 %475, %v410
        %v477 = vpop.permute.xlu0 %476
        %480 = vset.pattern.permute.xlu0 0
        %481 = vperm.xlu0 %480, %v411
        %v482 = vpop.permute.xlu0 %481
        %485 = vset.pattern.permute.xlu0 0
        %486 = vperm.xlu0 %485, %v412
        %v487 = vpop.permute.xlu0 %486
        %490 = vset.pattern.permute.xlu0 0
        %491 = vperm.xlu0 %490, %v413
        %v492 = vpop.permute.xlu0 %491
        %v494 = vmul.f32 %v382, %v417
        %v495 = vmul.f32 %v383, %v422
        %v496 = vmul.f32 %v384, %v427
        %v497 = vmul.f32 %v385, %v432
        %v498 = vmul.f32 %v386, %v437
        %v499 = vmul.f32 %v387, %v442
        %v500 = vmul.f32 %v388, %v447
        %v501 = vmul.f32 %v389, %v452
        %v502 = vmul.f32 %v390, %v457
        %v503 = vmul.f32 %v391, %v462
        %v504 = vmul.f32 %v392, %v467
        %v505 = vmul.f32 %v393, %v472
        %v506 = vmul.f32 %v394, %v477
        %v507 = vmul.f32 %v395, %v482
        %v508 = vmul.f32 %v396, %v487
        %v509 = vmul.f32 %v397, %v492
        %v510 = vld [vmem:[%s2] sm:$0x1]
        %v512 = vlaneseq
        %v513 = vshrl.u32 %v512, 7
        %v514 = vsub.s32 0, %v513
        %v515 = vrot.slane %v510, %v514
        %v517 = vmul.f32 %v494, %v515
        %v518 = vmul.f32 %v495, %v515
        %v519 = vmul.f32 %v496, %v515
        %v520 = vmul.f32 %v497, %v515
        %v521 = vmul.f32 %v498, %v515
        %v522 = vmul.f32 %v499, %v515
        %v523 = vmul.f32 %v500, %v515
        %v524 = vmul.f32 %v501, %v515
        %v525 = vmul.f32 %v502, %v515
        %v526 = vmul.f32 %v503, %v515
        %v527 = vmul.f32 %v504, %v515
        %v528 = vmul.f32 %v505, %v515
        %v529 = vmul.f32 %v506, %v515
        %v530 = vmul.f32 %v507, %v515
        %v531 = vmul.f32 %v508, %v515
        %v532 = vmul.f32 %v509, %v515
        %v533 = vpack.c.bf16 %v518, %v517
        %v534 = vpack.c.bf16 %v520, %v519
        %v535 = vpack.c.bf16 %v522, %v521
        %v536 = vpack.c.bf16 %v524, %v523
        %v537 = vpack.c.bf16 %v526, %v525
        %v538 = vpack.c.bf16 %v528, %v527
        %v539 = vpack.c.bf16 %v530, %v529
        %v540 = vpack.c.bf16 %v532, %v531
        %p541 = scmp.eq.s32.totalorder %s26, 0
        // Predicated region
        $region61: #{tpu_custom_call.1} parent=51 // pred_check
          %p542 = pneg %p541
        $region62: #{tpu_custom_call.1} parent=51 // pred_check_branch
          %544 = sbr.rel (%p542) target = $region64
        $region63: #{tpu_custom_call.1} parent=51 // pred_region
          %v545 = vld [vmem:[%s3] sm:$0xf]
          %v546 = vld [vmem:[%s3 + $0x4] sm:$0xf]
          %v547 = vld [vmem:[%s3 + $0x8] sm:$0xf]
          %v548 = vld [vmem:[%s3 + $0xc] sm:$0xf]
          %v549 = vld [vmem:[%s3 + $0x10] sm:$0xf]
          %v550 = vld [vmem:[%s3 + $0x14] sm:$0xf]
          %v551 = vld [vmem:[%s3 + $0x18] sm:$0xf]
          %v552 = vld [vmem:[%s3 + $0x1c] sm:$0xf]
          %v553 = vld [vmem:[%s3 + $0x20] sm:$0xf]
          %v554 = vld [vmem:[%s3 + $0x24] sm:$0xf]
          %v555 = vld [vmem:[%s3 + $0x28] sm:$0xf]
          %v556 = vld [vmem:[%s3 + $0x2c] sm:$0xf]
          %v557 = vld [vmem:[%s3 + $0x30] sm:$0xf]
          %v558 = vld [vmem:[%s3 + $0x34] sm:$0xf]
          %v559 = vld [vmem:[%s3 + $0x38] sm:$0xf]
          %v560 = vld [vmem:[%s3 + $0x3c] sm:$0xf]
          %v577 = vunpack.c.l.b16 %v545
          %v578 = vunpack.c.l.b16 %v546
          %v579 = vunpack.c.l.b16 %v547
          %v580 = vunpack.c.l.b16 %v548
          %v581 = vunpack.c.l.b16 %v549
          %v582 = vunpack.c.l.b16 %v550
          %v583 = vunpack.c.l.b16 %v551
          %v584 = vunpack.c.l.b16 %v552
          %v585 = vunpack.c.l.b16 %v553
          %v586 = vunpack.c.l.b16 %v554
          %v587 = vunpack.c.l.b16 %v555
          %v588 = vunpack.c.l.b16 %v556
          %v589 = vunpack.c.l.b16 %v557
          %v590 = vunpack.c.l.b16 %v558
          %v591 = vunpack.c.l.b16 %v559
          %v592 = vunpack.c.l.b16 %v560
          %v593 = vpack.c.b16 %v578, %v577
          %v594 = vpack.c.b16 %v580, %v579
          %v595 = vpack.c.b16 %v582, %v581
          %v596 = vpack.c.b16 %v584, %v583
          %v597 = vpack.c.b16 %v586, %v585
          %v598 = vpack.c.b16 %v588, %v587
          %v599 = vpack.c.b16 %v590, %v589
          %v600 = vpack.c.b16 %v592, %v591
          %609 = vmatprep.subr.bf16.mxu0 0
          %610 = vmatpush1.bf16.msra.mxu0 %v593
          %611 = vmatprep.subr.bf16.mxu0 0
          %612 = vmatpush1.bf16.msra.mxu0 %v594
          %613 = vmatprep.subr.bf16.mxu0 0
          %614 = vmatpush1.bf16.msra.mxu0 %v595
          %615 = vmatprep.subr.bf16.mxu0 0
          %616 = vmatpush1.bf16.msra.mxu0 %v596
          %617 = vmatprep.subr.bf16.mxu0 0
          %618 = vmatpush1.bf16.msra.mxu0 %v597
          %619 = vmatprep.subr.bf16.mxu0 0
          %620 = vmatpush1.bf16.msra.mxu0 %v598
          %621 = vmatprep.subr.bf16.mxu0 0
          %622 = vmatpush1.bf16.msra.mxu0 %v599
          %623 = vmatprep.subr.bf16.mxu0 0
          %624 = vmatpush1.bf16.msra.mxu0 %v600
          %625 = vmatprep.subr.bf16.mxu0 0
          %626 = vmatpush1.bf16.msra.mxu0 0
          %627 = vmatprep.subr.bf16.mxu0 0
          %628 = vmatpush1.bf16.msra.mxu0 0
          %629 = vmatprep.subr.bf16.mxu0 0
          %630 = vmatpush1.bf16.msra.mxu0 0
          %631 = vmatprep.subr.bf16.mxu0 0
          %632 = vmatpush1.bf16.msra.mxu0 0
          %633 = vmatprep.subr.bf16.mxu0 0
          %634 = vmatpush1.bf16.msra.mxu0 0
          %635 = vmatprep.subr.bf16.mxu0 0
          %636 = vmatpush1.bf16.msra.mxu0 0
          %637 = vmatprep.subr.bf16.mxu0 0
          %638 = vmatpush1.bf16.msra.mxu0 0
          %639 = vmatprep.subr.bf16.mxu0 0
          %640 = vmatpush1.bf16.msra.mxu0 0
          %641 = vmatprep.mubr.bf16.mxu0 0
          %642 = vmatmul.mubr.bf16.gmra.mrb[0].mxu0 %v533
          %v643 = vpop.f32.mrb[0].mxu0
          %v644 = vadd.f32 0.0, %v643
          %v645 = vpop.f32.mrb[0].mxu0
          %v646 = vpop.f32.mrb[0].mxu0
          %v647 = vadd.f32 0.0, %v646
          %v648 = vpop.f32.mrb[0].mxu0
          %649 = vmatprep.mubr.bf16.mxu0 0
          %650 = vmatmul.mubr.bf16.gmra.mrb[0].mxu0 %v534
          %v651 = vpop.f32.mrb[0].mxu0
          %v652 = vadd.f32 0.0, %v651
          %v653 = vpop.f32.mrb[0].mxu0
          %v654 = vpop.f32.mrb[0].mxu0
          %v655 = vadd.f32 0.0, %v654
          %v656 = vpop.f32.mrb[0].mxu0
          %657 = vmatprep.mubr.bf16.mxu0 0
          %658 = vmatmul.mubr.bf16.gmra.mrb[0].mxu0 %v535
          %v659 = vpop.f32.mrb[0].mxu0
          %v660 = vadd.f32 0.0, %v659
          %v661 = vpop.f32.mrb[0].mxu0
          %v662 = vpop.f32.mrb[0].mxu0
          %v663 = vadd.f32 0.0, %v662
          %v664 = vpop.f32.mrb[0].mxu0
          %665 = vmatprep.mubr.bf16.mxu0 0
          %666 = vmatmul.mubr.bf16.gmra.mrb[0].mxu0 %v536
          %v667 = vpop.f32.mrb[0].mxu0
          %v668 = vadd.f32 0.0, %v667
          %v669 = vpop.f32.mrb[0].mxu0
          %v670 = vpop.f32.mrb[0].mxu0
          %v671 = vadd.f32 0.0, %v670
          %v672 = vpop.f32.mrb[0].mxu0
          %673 = vmatprep.mubr.bf16.mxu0 0
          %674 = vmatmul.mubr.bf16.gmra.mrb[0].mxu0 %v537
          %v675 = vpop.f32.mrb[0].mxu0
          %v676 = vadd.f32 0.0, %v675
          %v677 = vpop.f32.mrb[0].mxu0
          %v678 = vpop.f32.mrb[0].mxu0
          %v679 = vadd.f32 0.0, %v678
          %v680 = vpop.f32.mrb[0].mxu0
          %681 = vmatprep.mubr.bf16.mxu0 0
          %682 = vmatmul.mubr.bf16.gmra.mrb[0].mxu0 %v538
          %v683 = vpop.f32.mrb[0].mxu0
          %v684 = vadd.f32 0.0, %v683
          %v685 = vpop.f32.mrb[0].mxu0
          %v686 = vpop.f32.mrb[0].mxu0
          %v687 = vadd.f32 0.0, %v686
          %v688 = vpop.f32.mrb[0].mxu0
          %689 = vmatprep.mubr.bf16.mxu0 0
          %690 = vmatmul.mubr.bf16.gmra.mrb[0].mxu0 %v539
          %v691 = vpop.f32.mrb[0].mxu0
          %v692 = vadd.f32 0.0, %v691
          %v693 = vpop.f32.mrb[0].mxu0
          %v694 = vpop.f32.mrb[0].mxu0
          %v695 = vadd.f32 0.0, %v694
          %v696 = vpop.f32.mrb[0].mxu0
          %697 = vmatprep.mubr.bf16.mxu0 0
          %698 = vmatmul.mubr.bf16.gmra.mrb[0].mxu0 %v540
          %v699 = vpop.f32.mrb[0].mxu0
          %v700 = vadd.f32 0.0, %v699
          %v701 = vpop.f32.mrb[0].mxu0
          %v702 = vpop.f32.mrb[0].mxu0
          %v703 = vadd.f32 0.0, %v702
          %v704 = vpop.f32.mrb[0].mxu0
          %705 = vdwg.mxu0
          %v706 = vpack.c.bf16 %v647, %v644
          %v707 = vpack.c.bf16 %v655, %v652
          %v708 = vpack.c.bf16 %v663, %v660
          %v709 = vpack.c.bf16 %v671, %v668
          %v710 = vpack.c.bf16 %v679, %v676
          %v711 = vpack.c.bf16 %v687, %v684
          %v712 = vpack.c.bf16 %v695, %v692
          %v713 = vpack.c.bf16 %v703, %v700
          %v714 = vld [vmem:[#allocation3] sm:$0xf]
          %v715 = vld [vmem:[#allocation3 + $0x4] sm:$0xf]
          %v716 = vld [vmem:[#allocation3 + $0x8] sm:$0xf]
          %v717 = vld [vmem:[#allocation3 + $0xc] sm:$0xf]
          %v718 = vld [vmem:[#allocation3 + $0x10] sm:$0xf]
          %v719 = vld [vmem:[#allocation3 + $0x14] sm:$0xf]
          %v720 = vld [vmem:[#allocation3 + $0x18] sm:$0xf]
          %v721 = vld [vmem:[#allocation3 + $0x1c] sm:$0xf]
          %v722 = vld [vmem:[#allocation3 + $0x20] sm:$0xf]
          %v723 = vld [vmem:[#allocation3 + $0x24] sm:$0xf]
          %v724 = vld [vmem:[#allocation3 + $0x28] sm:$0xf]
          %v725 = vld [vmem:[#allocation3 + $0x2c] sm:$0xf]
          %v726 = vld [vmem:[#allocation3 + $0x30] sm:$0xf]
          %v727 = vld [vmem:[#allocation3 + $0x34] sm:$0xf]
          %v728 = vld [vmem:[#allocation3 + $0x38] sm:$0xf]
          %v729 = vld [vmem:[#allocation3 + $0x3c] sm:$0xf]
          %v730 = vld [vmem:[%s5] sm:$0x1]
          %v732 = vlaneseq
          %v733 = vshrl.u32 %v732, 7
          %v734 = vsub.s32 0, %v733
          %v735 = vrot.slane %v730, %v734
          %v753 = vunpack.c.l.b16 %v714
          %v754 = vunpack.c.l.b16 %v715
          %v755 = vunpack.c.l.b16 %v716
          %v756 = vunpack.c.l.b16 %v717
          %v757 = vunpack.c.l.b16 %v718
          %v758 = vunpack.c.l.b16 %v719
          %v759 = vunpack.c.l.b16 %v720
          %v760 = vunpack.c.l.b16 %v721
          %v761 = vunpack.c.l.b16 %v722
          %v762 = vunpack.c.l.b16 %v723
          %v763 = vunpack.c.l.b16 %v724
          %v764 = vunpack.c.l.b16 %v725
          %v765 = vunpack.c.l.b16 %v726
          %v766 = vunpack.c.l.b16 %v727
          %v767 = vunpack.c.l.b16 %v728
          %v768 = vunpack.c.l.b16 %v729
          %v769 = vpack.c.b16 %v754, %v753
          %v770 = vpack.c.b16 %v756, %v755
          %v771 = vpack.c.b16 %v758, %v757
          %v772 = vpack.c.b16 %v760, %v759
          %v773 = vpack.c.b16 %v762, %v761
          %v774 = vpack.c.b16 %v764, %v763
          %v775 = vpack.c.b16 %v766, %v765
          %v776 = vpack.c.b16 %v768, %v767
          %785 = vmatprep.subr.bf16.mxu0 0
          %786 = vmatpush1.bf16.msra.mxu0 %v769
          %787 = vmatprep.subr.bf16.mxu0 0
          %788 = vmatpush1.bf16.msra.mxu0 %v770
          %789 = vmatprep.subr.bf16.mxu0 0
          %790 = vmatpush1.bf16.msra.mxu0 %v771
          %791 = vmatprep.subr.bf16.mxu0 0
          %792 = vmatpush1.bf16.msra.mxu0 %v772
          %793 = vmatprep.subr.bf16.mxu0 0
          %794 = vmatpush1.bf16.msra.mxu0 %v773
          %795 = vmatprep.subr.bf16.mxu0 0
          %796 = vmatpush1.bf16.msra.mxu0 %v774
          %797 = vmatprep.subr.bf16.mxu0 0
          %798 = vmatpush1.bf16.msra.mxu0 %v775
          %799 = vmatprep.subr.bf16.mxu0 0
          %800 = vmatpush1.bf16.msra.mxu0 %v776
          %801 = vmatprep.subr.bf16.mxu0 0
          %802 = vmatpush1.bf16.msra.mxu0 0
          %803 = vmatprep.subr.bf16.mxu0 0
          %804 = vmatpush1.bf16.msra.mxu0 0
          %805 = vmatprep.subr.bf16.mxu0 0
          %806 = vmatpush1.bf16.msra.mxu0 0
          %807 = vmatprep.subr.bf16.mxu0 0
          %808 = vmatpush1.bf16.msra.mxu0 0
          %809 = vmatprep.subr.bf16.mxu0 0
          %810 = vmatpush1.bf16.msra.mxu0 0
          %811 = vmatprep.subr.bf16.mxu0 0
          %812 = vmatpush1.bf16.msra.mxu0 0
          %813 = vmatprep.subr.bf16.mxu0 0
          %814 = vmatpush1.bf16.msra.mxu0 0
          %815 = vmatprep.subr.bf16.mxu0 0
          %816 = vmatpush1.bf16.msra.mxu0 0
          %817 = vmatprep.mubr.bf16.mxu0 0
          %818 = vmatmul.mubr.bf16.gmra.mrb[0].mxu0 %v706
          %v819 = vpop.f32.mrb[0].mxu0
          %v820 = vadd.f32 %v735, %v819
          %v821 = vpop.f32.mrb[0].mxu0
          %v822 = vpop.f32.mrb[0].mxu0
          %v823 = vadd.f32 %v735, %v822
          %v824 = vpop.f32.mrb[0].mxu0
          %825 = vmatprep.mubr.bf16.mxu0 0
          %826 = vmatmul.mubr.bf16.gmra.mrb[0].mxu0 %v707
          %v827 = vpop.f32.mrb[0].mxu0
          %v828 = vadd.f32 %v735, %v827
          %v829 = vpop.f32.mrb[0].mxu0
          %v830 = vpop.f32.mrb[0].mxu0
          %v831 = vadd.f32 %v735, %v830
          %v832 = vpop.f32.mrb[0].mxu0
          %833 = vmatprep.mubr.bf16.mxu0 0
          %834 = vmatmul.mubr.bf16.gmra.mrb[0].mxu0 %v708
          %v835 = vpop.f32.mrb[0].mxu0
          %v836 = vadd.f32 %v735, %v835
          %v837 = vpop.f32.mrb[0].mxu0
          %v838 = vpop.f32.mrb[0].mxu0
          %v839 = vadd.f32 %v735, %v838
          %v840 = vpop.f32.mrb[0].mxu0
          %841 = vmatprep.mubr.bf16.mxu0 0
          %842 = vmatmul.mubr.bf16.gmra.mrb[0].mxu0 %v709
          %v843 = vpop.f32.mrb[0].mxu0
          %v844 = vadd.f32 %v735, %v843
          %v845 = vpop.f32.mrb[0].mxu0
          %v846 = vpop.f32.mrb[0].mxu0
          %v847 = vadd.f32 %v735, %v846
          %v848 = vpop.f32.mrb[0].mxu0
          %849 = vmatprep.mubr.bf16.mxu0 0
          %850 = vmatmul.mubr.bf16.gmra.mrb[0].mxu0 %v710
          %v851 = vpop.f32.mrb[0].mxu0
          %v852 = vadd.f32 %v735, %v851
          %v853 = vpop.f32.mrb[0].mxu0
          %v854 = vpop.f32.mrb[0].mxu0
          %v855 = vadd.f32 %v735, %v854
          %v856 = vpop.f32.mrb[0].mxu0
          %857 = vmatprep.mubr.bf16.mxu0 0
          %858 = vmatmul.mubr.bf16.gmra.mrb[0].mxu0 %v711
          %v859 = vpop.f32.mrb[0].mxu0
          %v860 = vadd.f32 %v735, %v859
          %v861 = vpop.f32.mrb[0].mxu0
          %v862 = vpop.f32.mrb[0].mxu0
          %v863 = vadd.f32 %v735, %v862
          %v864 = vpop.f32.mrb[0].mxu0
          %865 = vmatprep.mubr.bf16.mxu0 0
          %866 = vmatmul.mubr.bf16.gmra.mrb[0].mxu0 %v712
          %v867 = vpop.f32.mrb[0].mxu0
          %v868 = vadd.f32 %v735, %v867
          %v869 = vpop.f32.mrb[0].mxu0
          %v870 = vpop.f32.mrb[0].mxu0
          %v871 = vadd.f32 %v735, %v870
          %v872 = vpop.f32.mrb[0].mxu0
          %873 = vmatprep.mubr.bf16.mxu0 0
          %874 = vmatmul.mubr.bf16.gmra.mrb[0].mxu0 %v713
          %v875 = vpop.f32.mrb[0].mxu0
          %v876 = vadd.f32 %v735, %v875
          %v877 = vpop.f32.mrb[0].mxu0
          %v878 = vpop.f32.mrb[0].mxu0
          %v879 = vadd.f32 %v735, %v878
          %v880 = vpop.f32.mrb[0].mxu0
          %881 = vdwg.mxu0
          %v882 = vmax.f32 %v820, 0.0
          %v883 = vmax.f32 %v823, 0.0
          %v884 = vmax.f32 %v828, 0.0
          %v885 = vmax.f32 %v831, 0.0
          %v886 = vmax.f32 %v836, 0.0
          %v887 = vmax.f32 %v839, 0.0
          %v888 = vmax.f32 %v844, 0.0
          %v889 = vmax.f32 %v847, 0.0
          %v890 = vmax.f32 %v852, 0.0
          %v891 = vmax.f32 %v855, 0.0
          %v892 = vmax.f32 %v860, 0.0
          %v893 = vmax.f32 %v863, 0.0
          %v894 = vmax.f32 %v868, 0.0
          %v895 = vmax.f32 %v871, 0.0
          %v896 = vmax.f32 %v876, 0.0
          %v897 = vmax.f32 %v879, 0.0
          %v898 = vpack.c.bf16 %v883, %v882
          %v899 = vpack.c.bf16 %v885, %v884
          %v900 = vpack.c.bf16 %v887, %v886
          %v901 = vpack.c.bf16 %v889, %v888
          %v902 = vpack.c.bf16 %v891, %v890
          %v903 = vpack.c.bf16 %v893, %v892
          %v904 = vpack.c.bf16 %v895, %v894
          %v905 = vpack.c.bf16 %v897, %v896
          %s906 = sshra.s32 %s365, 4
          %s907 = sand.u32 %s365, 15
          %s908 = smul.addr %s906, 8
          %s909 = scalar_lea.vmem [#allocation2], %s908
          %910 = vst [vmem:[%s909] sm:$0xff] %v898
          %911 = vst [vmem:[%s909 + $0x8] sm:$0xff] %v899
          %912 = vst [vmem:[%s909 + $0x10] sm:$0xff] %v900
          %913 = vst [vmem:[%s909 + $0x18] sm:$0xff] %v901
          %914 = vst [vmem:[%s909 + $0x20] sm:$0xff] %v902
          %915 = vst [vmem:[%s909 + $0x28] sm:$0xff] %v903
          %916 = vst [vmem:[%s909 + $0x30] sm:$0xff] %v904
          %917 = vst [vmem:[%s909 + $0x38] sm:$0xff] %v905
        $region64: #{tpu_custom_call.1} parent=51 // pred_fallthru
          _
        %p918 = scmp.eq.s32.totalorder %s26, 1
        // Predicated region
        $region65: #{tpu_custom_call.1} parent=51 // pred_check
          %p919 = pneg %p918
        $region66: #{tpu_custom_call.1} parent=51 // pred_check_branch
          %921 = sbr.rel (%p919) target = $region68
        $region67: #{tpu_custom_call.1} parent=51 // pred_region
          %v922 = vld [vmem:[#allocation2] sm:$0xff]
          %v923 = vld [vmem:[#allocation2 + $0x8] sm:$0xff]
          %v924 = vld [vmem:[#allocation2 + $0x10] sm:$0xff]
          %v925 = vld [vmem:[#allocation2 + $0x18] sm:$0xff]
          %v926 = vld [vmem:[#allocation2 + $0x20] sm:$0xff]
          %v927 = vld [vmem:[#allocation2 + $0x28] sm:$0xff]
          %v928 = vld [vmem:[#allocation2 + $0x30] sm:$0xff]
          %v929 = vld [vmem:[#allocation2 + $0x38] sm:$0xff]
          %930 = vmatprep.subr.bf16.mxu0 0
          %931 = vmatpush1.bf16.msra.mxu0 %v922
          %932 = vmatprep.subr.bf16.mxu0 0
          %933 = vmatpush1.bf16.msra.mxu0 %v923
          %934 = vmatprep.subr.bf16.mxu0 0
          %935 = vmatpush1.bf16.msra.mxu0 %v924
          %936 = vmatprep.subr.bf16.mxu0 0
          %937 = vmatpush1.bf16.msra.mxu0 %v925
          %938 = vmatprep.subr.bf16.mxu0 0
          %939 = vmatpush1.bf16.msra.mxu0 %v926
          %940 = vmatprep.subr.bf16.mxu0 0
          %941 = vmatpush1.bf16.msra.mxu0 %v927
          %942 = vmatprep.subr.bf16.mxu0 0
          %943 = vmatpush1.bf16.msra.mxu0 %v928
          %944 = vmatprep.subr.bf16.mxu0 0
          %945 = vmatpush1.bf16.msra.mxu0 %v929
          %946 = vmatprep.subr.bf16.mxu0 0
          %947 = vmatpush1.bf16.msra.mxu0 0
          %948 = vmatprep.subr.bf16.mxu0 0
          %949 = vmatpush1.bf16.msra.mxu0 0
          %950 = vmatprep.subr.bf16.mxu0 0
          %951 = vmatpush1.bf16.msra.mxu0 0
          %952 = vmatprep.subr.bf16.mxu0 0
          %953 = vmatpush1.bf16.msra.mxu0 0
          %954 = vmatprep.subr.bf16.mxu0 0
          %955 = vmatpush1.bf16.msra.mxu0 0
          %956 = vmatprep.subr.bf16.mxu0 0
          %957 = vmatpush1.bf16.msra.mxu0 0
          %958 = vmatprep.subr.bf16.mxu0 0
          %959 = vmatpush1.bf16.msra.mxu0 0
          %960 = vmatprep.subr.bf16.mxu0 0
          %961 = vmatpush1.bf16.msra.mxu0 0
          %962 = vmatprep.mubr.bf16.mxu0 0
          %963 = vmatmul.mubr.bf16.gmra.mrb[0].mxu0 %v533
          %v964 = vpop.f32.mrb[0].mxu0
          %v965 = vadd.f32 0.0, %v964
          %v966 = vpop.f32.mrb[0].mxu0
          %v967 = vpop.f32.mrb[0].mxu0
          %v968 = vadd.f32 0.0, %v967
          %v969 = vpop.f32.mrb[0].mxu0
          %970 = vmatprep.mubr.bf16.mxu0 0
          %971 = vmatmul.mubr.bf16.gmra.mrb[0].mxu0 %v534
          %v972 = vpop.f32.mrb[0].mxu0
          %v973 = vadd.f32 0.0, %v972
          %v974 = vpop.f32.mrb[0].mxu0
          %v975 = vpop.f32.mrb[0].mxu0
          %v976 = vadd.f32 0.0, %v975
          %v977 = vpop.f32.mrb[0].mxu0
          %978 = vmatprep.mubr.bf16.mxu0 0
          %979 = vmatmul.mubr.bf16.gmra.mrb[0].mxu0 %v535
          %v980 = vpop.f32.mrb[0].mxu0
          %v981 = vadd.f32 0.0, %v980
          %v982 = vpop.f32.mrb[0].mxu0
          %v983 = vpop.f32.mrb[0].mxu0
          %v984 = vadd.f32 0.0, %v983
          %v985 = vpop.f32.mrb[0].mxu0
          %986 = vmatprep.mubr.bf16.mxu0 0
          %987 = vmatmul.mubr.bf16.gmra.mrb[0].mxu0 %v536
          %v988 = vpop.f32.mrb[0].mxu0
          %v989 = vadd.f32 0.0, %v988
          %v990 = vpop.f32.mrb[0].mxu0
          %v991 = vpop.f32.mrb[0].mxu0
          %v992 = vadd.f32 0.0, %v991
          %v993 = vpop.f32.mrb[0].mxu0
          %994 = vmatprep.mubr.bf16.mxu0 0
          %995 = vmatmul.mubr.bf16.gmra.mrb[0].mxu0 %v537
          %v996 = vpop.f32.mrb[0].mxu0
          %v997 = vadd.f32 0.0, %v996
          %v998 = vpop.f32.mrb[0].mxu0
          %v999 = vpop.f32.mrb[0].mxu0
          %v1000 = vadd.f32 0.0, %v999
          %v1001 = vpop.f32.mrb[0].mxu0
          %1002 = vmatprep.mubr.bf16.mxu0 0
          %1003 = vmatmul.mubr.bf16.gmra.mrb[0].mxu0 %v538
          %v1004 = vpop.f32.mrb[0].mxu0
          %v1005 = vadd.f32 0.0, %v1004
          %v1006 = vpop.f32.mrb[0].mxu0
          %v1007 = vpop.f32.mrb[0].mxu0
          %v1008 = vadd.f32 0.0, %v1007
          %v1009 = vpop.f32.mrb[0].mxu0
          %1010 = vmatprep.mubr.bf16.mxu0 0
          %1011 = vmatmul.mubr.bf16.gmra.mrb[0].mxu0 %v539
          %v1012 = vpop.f32.mrb[0].mxu0
          %v1013 = vadd.f32 0.0, %v1012
          %v1014 = vpop.f32.mrb[0].mxu0
          %v1015 = vpop.f32.mrb[0].mxu0
          %v1016 = vadd.f32 0.0, %v1015
          %v1017 = vpop.f32.mrb[0].mxu0
          %1018 = vmatprep.mubr.bf16.mxu0 0
          %1019 = vmatmul.mubr.bf16.gmra.mrb[0].mxu0 %v540
          %v1020 = vpop.f32.mrb[0].mxu0
          %v1021 = vadd.f32 0.0, %v1020
          %v1022 = vpop.f32.mrb[0].mxu0
          %v1023 = vpop.f32.mrb[0].mxu0
          %v1024 = vadd.f32 0.0, %v1023
          %v1025 = vpop.f32.mrb[0].mxu0
          %1026 = vdwg.mxu0
          %v1027 = vpack.c.bf16 %v968, %v965
          %v1028 = vpack.c.bf16 %v976, %v973
          %v1029 = vpack.c.bf16 %v984, %v981
          %v1030 = vpack.c.bf16 %v992, %v989
          %v1031 = vpack.c.bf16 %v1000, %v997
          %v1032 = vpack.c.bf16 %v1008, %v1005
          %v1033 = vpack.c.bf16 %v1016, %v1013
          %v1034 = vpack.c.bf16 %v1024, %v1021
          %v1035 = vld [vmem:[#allocation6] sm:$0xf]
          %v1036 = vld [vmem:[#allocation6 + $0x4] sm:$0xf]
          %v1037 = vld [vmem:[#allocation6 + $0x8] sm:$0xf]
          %v1038 = vld [vmem:[#allocation6 + $0xc] sm:$0xf]
          %v1039 = vld [vmem:[#allocation6 + $0x10] sm:$0xf]
          %v1040 = vld [vmem:[#allocation6 + $0x14] sm:$0xf]
          %v1041 = vld [vmem:[#allocation6 + $0x18] sm:$0xf]
          %v1042 = vld [vmem:[#allocation6 + $0x1c] sm:$0xf]
          %v1043 = vld [vmem:[#allocation6 + $0x20] sm:$0xf]
          %v1044 = vld [vmem:[#allocation6 + $0x24] sm:$0xf]
          %v1045 = vld [vmem:[#allocation6 + $0x28] sm:$0xf]
          %v1046 = vld [vmem:[#allocation6 + $0x2c] sm:$0xf]
          %v1047 = vld [vmem:[#allocation6 + $0x30] sm:$0xf]
          %v1048 = vld [vmem:[#allocation6 + $0x34] sm:$0xf]
          %v1049 = vld [vmem:[#allocation6 + $0x38] sm:$0xf]
          %v1050 = vld [vmem:[#allocation6 + $0x3c] sm:$0xf]
          %v1051 = vld [vmem:[%s7] sm:$0x1]
          %v1053 = vlaneseq
          %v1054 = vshrl.u32 %v1053, 7
          %v1055 = vsub.s32 0, %v1054
          %v1056 = vrot.slane %v1051, %v1055
          %v1074 = vunpack.c.l.b16 %v1035
          %v1075 = vunpack.c.l.b16 %v1036
          %v1076 = vunpack.c.l.b16 %v1037
          %v1077 = vunpack.c.l.b16 %v1038
          %v1078 = vunpack.c.l.b16 %v1039
          %v1079 = vunpack.c.l.b16 %v1040
          %v1080 = vunpack.c.l.b16 %v1041
          %v1081 = vunpack.c.l.b16 %v1042
          %v1082 = vunpack.c.l.b16 %v1043
          %v1083 = vunpack.c.l.b16 %v1044
          %v1084 = vunpack.c.l.b16 %v1045
          %v1085 = vunpack.c.l.b16 %v1046
          %v1086 = vunpack.c.l.b16 %v1047
          %v1087 = vunpack.c.l.b16 %v1048
          %v1088 = vunpack.c.l.b16 %v1049
          %v1089 = vunpack.c.l.b16 %v1050
          %v1090 = vpack.c.b16 %v1075, %v1074
          %v1091 = vpack.c.b16 %v1077, %v1076
          %v1092 = vpack.c.b16 %v1079, %v1078
          %v1093 = vpack.c.b16 %v1081, %v1080
          %v1094 = vpack.c.b16 %v1083, %v1082
          %v1095 = vpack.c.b16 %v1085, %v1084
          %v1096 = vpack.c.b16 %v1087, %v1086
          %v1097 = vpack.c.b16 %v1089, %v1088
          %1106 = vmatprep.subr.bf16.mxu0 0
          %1107 = vmatpush1.bf16.msra.mxu0 %v1090
          %1108 = vmatprep.subr.bf16.mxu0 0
          %1109 = vmatpush1.bf16.msra.mxu0 %v1091
          %1110 = vmatprep.subr.bf16.mxu0 0
          %1111 = vmatpush1.bf16.msra.mxu0 %v1092
          %1112 = vmatprep.subr.bf16.mxu0 0
          %1113 = vmatpush1.bf16.msra.mxu0 %v1093
          %1114 = vmatprep.subr.bf16.mxu0 0
          %1115 = vmatpush1.bf16.msra.mxu0 %v1094
          %1116 = vmatprep.subr.bf16.mxu0 0
          %1117 = vmatpush1.bf16.msra.mxu0 %v1095
          %1118 = vmatprep.subr.bf16.mxu0 0
          %1119 = vmatpush1.bf16.msra.mxu0 %v1096
          %1120 = vmatprep.subr.bf16.mxu0 0
          %1121 = vmatpush1.bf16.msra.mxu0 %v1097
          %1122 = vmatprep.subr.bf16.mxu0 0
          %1123 = vmatpush1.bf16.msra.mxu0 0
          %1124 = vmatprep.subr.bf16.mxu0 0
          %1125 = vmatpush1.bf16.msra.mxu0 0
          %1126 = vmatprep.subr.bf16.mxu0 0
          %1127 = vmatpush1.bf16.msra.mxu0 0
          %1128 = vmatprep.subr.bf16.mxu0 0
          %1129 = vmatpush1.bf16.msra.mxu0 0
          %1130 = vmatprep.subr.bf16.mxu0 0
          %1131 = vmatpush1.bf16.msra.mxu0 0
          %1132 = vmatprep.subr.bf16.mxu0 0
          %1133 = vmatpush1.bf16.msra.mxu0 0
          %1134 = vmatprep.subr.bf16.mxu0 0
          %1135 = vmatpush1.bf16.msra.mxu0 0
          %1136 = vmatprep.subr.bf16.mxu0 0
          %1137 = vmatpush1.bf16.msra.mxu0 0
          %1138 = vmatprep.mubr.bf16.mxu0 0
          %1139 = vmatmul.mubr.bf16.gmra.mrb[0].mxu0 %v1027
          %v1140 = vpop.f32.mrb[0].mxu0
          %v1141 = vadd.f32 %v1056, %v1140
          %v1142 = vpop.f32.mrb[0].mxu0
          %v1143 = vpop.f32.mrb[0].mxu0
          %v1144 = vadd.f32 %v1056, %v1143
          %v1145 = vpop.f32.mrb[0].mxu0
          %1146 = vmatprep.mubr.bf16.mxu0 0
          %1147 = vmatmul.mubr.bf16.gmra.mrb[0].mxu0 %v1028
          %v1148 = vpop.f32.mrb[0].mxu0
          %v1149 = vadd.f32 %v1056, %v1148
          %v1150 = vpop.f32.mrb[0].mxu0
          %v1151 = vpop.f32.mrb[0].mxu0
          %v1152 = vadd.f32 %v1056, %v1151
          %v1153 = vpop.f32.mrb[0].mxu0
          %1154 = vmatprep.mubr.bf16.mxu0 0
          %1155 = vmatmul.mubr.bf16.gmra.mrb[0].mxu0 %v1029
          %v1156 = vpop.f32.mrb[0].mxu0
          %v1157 = vadd.f32 %v1056, %v1156
          %v1158 = vpop.f32.mrb[0].mxu0
          %v1159 = vpop.f32.mrb[0].mxu0
          %v1160 = vadd.f32 %v1056, %v1159
          %v1161 = vpop.f32.mrb[0].mxu0
          %1162 = vmatprep.mubr.bf16.mxu0 0
          %1163 = vmatmul.mubr.bf16.gmra.mrb[0].mxu0 %v1030
          %v1164 = vpop.f32.mrb[0].mxu0
          %v1165 = vadd.f32 %v1056, %v1164
          %v1166 = vpop.f32.mrb[0].mxu0
          %v1167 = vpop.f32.mrb[0].mxu0
          %v1168 = vadd.f32 %v1056, %v1167
          %v1169 = vpop.f32.mrb[0].mxu0
          %1170 = vmatprep.mubr.bf16.mxu0 0
          %1171 = vmatmul.mubr.bf16.gmra.mrb[0].mxu0 %v1031
          %v1172 = vpop.f32.mrb[0].mxu0
          %v1173 = vadd.f32 %v1056, %v1172
          %v1174 = vpop.f32.mrb[0].mxu0
          %v1175 = vpop.f32.mrb[0].mxu0
          %v1176 = vadd.f32 %v1056, %v1175
          %v1177 = vpop.f32.mrb[0].mxu0
          %1178 = vmatprep.mubr.bf16.mxu0 0
          %1179 = vmatmul.mubr.bf16.gmra.mrb[0].mxu0 %v1032
          %v1180 = vpop.f32.mrb[0].mxu0
          %v1181 = vadd.f32 %v1056, %v1180
          %v1182 = vpop.f32.mrb[0].mxu0
          %v1183 = vpop.f32.mrb[0].mxu0
          %v1184 = vadd.f32 %v1056, %v1183
          %v1185 = vpop.f32.mrb[0].mxu0
          %1186 = vmatprep.mubr.bf16.mxu0 0
          %1187 = vmatmul.mubr.bf16.gmra.mrb[0].mxu0 %v1033
          %v1188 = vpop.f32.mrb[0].mxu0
          %v1189 = vadd.f32 %v1056, %v1188
          %v1190 = vpop.f32.mrb[0].mxu0
          %v1191 = vpop.f32.mrb[0].mxu0
          %v1192 = vadd.f32 %v1056, %v1191
          %v1193 = vpop.f32.mrb[0].mxu0
          %1194 = vmatprep.mubr.bf16.mxu0 0
          %1195 = vmatmul.mubr.bf16.gmra.mrb[0].mxu0 %v1034
          %v1196 = vpop.f32.mrb[0].mxu0
          %v1197 = vadd.f32 %v1056, %v1196
          %v1198 = vpop.f32.mrb[0].mxu0
          %v1199 = vpop.f32.mrb[0].mxu0
          %v1200 = vadd.f32 %v1056, %v1199
          %v1201 = vpop.f32.mrb[0].mxu0
          %1202 = vdwg.mxu0
          %1203 = vst [vmem:[#allocation8] sm:$0xff] %v1141
          %1204 = vst [vmem:[#allocation8 + $0x8] sm:$0xff] %v1144
          %1205 = vst [vmem:[#allocation8 + $0x10] sm:$0xff] %v1149
          %1206 = vst [vmem:[#allocation8 + $0x18] sm:$0xff] %v1152
          %1207 = vst [vmem:[#allocation8 + $0x20] sm:$0xff] %v1157
          %1208 = vst [vmem:[#allocation8 + $0x28] sm:$0xff] %v1160
          %1209 = vst [vmem:[#allocation8 + $0x30] sm:$0xff] %v1165
          %1210 = vst [vmem:[#allocation8 + $0x38] sm:$0xff] %v1168
          %1211 = vst [vmem:[#allocation8 + $0x40] sm:$0xff] %v1173
          %1212 = vst [vmem:[#allocation8 + $0x48] sm:$0xff] %v1176
          %1213 = vst [vmem:[#allocation8 + $0x50] sm:$0xff] %v1181
          %1214 = vst [vmem:[#allocation8 + $0x58] sm:$0xff] %v1184
          %1215 = vst [vmem:[#allocation8 + $0x60] sm:$0xff] %v1189
          %1216 = vst [vmem:[#allocation8 + $0x68] sm:$0xff] %v1192
          %1217 = vst [vmem:[#allocation8 + $0x70] sm:$0xff] %v1197
          %1218 = vst [vmem:[#allocation8 + $0x78] sm:$0xff] %v1200
        $region68: #{tpu_custom_call.1} parent=51 // pred_fallthru
          _
        // Predicated region
        $region69: #{tpu_custom_call.1} parent=51 // pred_check
          %p1219 = pneg %p230
        $region70: #{tpu_custom_call.1} parent=51 // pred_check_branch
          %1221 = sbr.rel (%p1219) target = $region72
        $region71: #{tpu_custom_call.1} parent=51 // pred_region
          %s1222 = smul.u32 16, %s27
          %s1224 = ssub.s32 2048, 2048
          %1225 = vsyncadd [#allocation5], %s1224
          %s1226 = smul.addr %s1222, 128
          %s1227 = scalar_lea.hbm %s8, %s1226
          %s1228 = sshll.u32 [#allocation8], 4
          %s1229 = int_to_ptr.vmem [resolvable:$true] %s1228
          %1234 = dma.vmem_to_hbm [thread:$0]  %s1229, 2048, %s1227, [#allocation5], 128, 128, 8
        $region72: #{tpu_custom_call.1} parent=51 // pred_fallthru
          _
        // Predicated region
        $region73: #{tpu_custom_call.1} parent=51 // pred_check
          %p1235 = pneg %p230
        $region74: #{tpu_custom_call.1} parent=51 // pred_check_branch
          %1237 = sbr.rel (%p1235) target = $region76
        $region75: #{tpu_custom_call.1} parent=51 // pred_region
          %1238 = dma.done [#allocation5], 2048
        $region76: #{tpu_custom_call.1} parent=51 // pred_fallthru
          _
      $region52: #{tpu_custom_call.1} parent=5 // pred_fallthru
        _
      %p1239 = scmp.le.s32.totalorder 2, %s17
      // Predicated region
      $region77: #{tpu_custom_call.1} parent=5 // pred_check
        %p1240 = pneg %p1239
      $region78: #{tpu_custom_call.1} parent=5 // pred_check_branch
        %1242 = sbr.rel (%p1240) target = $region80
      $region79: #{tpu_custom_call.1} parent=5 // pred_region
        %s1243 = ssub.s32 %s17, 2
      $region80: #{tpu_custom_call.1} parent=5 // pred_fallthru
        _
    $region6: #{tpu_custom_call.1} parent=1 // loop_footer
      %s21 = sadd.s32 1, %s17
    $region7: #{tpu_custom_call.1} parent=1 // loop_footer_branch
      %16 = sbr.rel target = $region3
    $region8: #{tpu_custom_call.1} parent=1 // loop_exit
      _
    %1244 = vsyncpa [#allocation4], 1
    %s1245 = scalar_lea.sflag [#allocation4], 1
    %1246 = vsyncpa %s1245, 1
    %1247 = vsyncpa [#allocation7], 1
    %1248 = vsyncpa [#allocation5], 1
    %s1249 = scalar_lea.sflag [#allocation5], 1
    %1250 = vsyncpa %s1249, 1

</llo_original>
